<compile_context>
chip_gen: v5e
topology: v5e:2x2
jax: 0.10.0
libtpu: 0.0.40
codegen_flags: <defaults>
</compile_context>

<pallas_src>
from functools import partial

import numpy as np
import jax
import jax.numpy as jnp
from jax import lax
from jax.experimental import pallas as pl
from jax.experimental.pallas import tpu as pltpu


def _cdiv(a: int, b: int) -> int:
    return -(-a // b)


def _round_up(x: int, m: int) -> int:
    return ((x + m - 1) // m) * m


# ----------------------------------------------------------------------------
# Kernel: accumulate the augmented Gram matrix  aug = A @ A^T  over lane tiles of N.
# Grid = (parallel_split, n_tile); the last axis is the reduction ("arbitrary"), and the
# output BlockSpec is constant over it, so the (Tp, Tp) accumulator stays VMEM-resident.
# ----------------------------------------------------------------------------
def _aug_gram_kernel(a_ref, out_ref):
    @pl.when(pl.program_id(1) == 0)
    def _init():
        out_ref[...] = jnp.zeros_like(out_ref)

    a = a_ref[...]  # (Tp, tile): lane-dense tile, N on the 128-lane axis
    # Contract the lane (N) axis of both operands: A @ A^T via the MXU transposed-weight
    # path -- no in-kernel transpose of the (Tp, tile) tile is emitted for this form.
    out_ref[...] += lax.dot_general(
        a, a,
        dimension_numbers=(((1,), (1,)), ((), ())),
        preferred_element_type=jnp.float32,
    )


def _gram_plan(n: int, p: int, tile_n: int):
    """Pick (tile, steps_per_core, padded_N) so tile is a multiple of 128, at most ~tile_n,
    and zero-padding waste is at most one 128-lane remainder per core."""
    total_per_core = _cdiv(n, p)
    steps = max(1, _cdiv(total_per_core, tile_n))
    tile = _round_up(_cdiv(total_per_core, steps), 128)
    n_pad = p * steps * tile
    return tile, steps, n_pad


@partial(jax.jit, static_argnames=("tile_n", "num_parallel", "stream_bf16", "ridge",
                                   "small_n_fallback"))
def least_squares_fit(sparse_thetas, time_derivs, *, tile_n=65536, num_parallel=1,
                      stream_bf16=False, ridge=0.0, small_n_fallback=8192):
    """Ordinary least squares via the fused normal equations  (theta^T theta) x = theta^T dt.

    gram / rhs come from a single lane-dense Pallas reduction over the augmented matrix
    A = [theta^T ; dt^T]; the tiny TxT solve stays in plain JAX.
    """
    N, T = sparse_thetas.shape
    Tp = T + 1
    in_dtype = jnp.bfloat16 if stream_bf16 else jnp.float32

    # Build A = [theta^T ; dt^T] (Tp, N) with the cast folded into the producer; under jit
    # the transpose/cast/concat/pad fuse into one producer of the padded operand.
    theta_t = sparse_thetas.T.astype(in_dtype)
    dt_row = time_derivs.reshape(1, N).astype(in_dtype)
    a = jnp.concatenate([theta_t, dt_row], axis=0)

    if N < small_n_fallback:
        # Tiny problems: pallas_call launch + padding overhead dominates -> plain XLA.
        aug = jnp.dot(a, a.T, preferred_element_type=jnp.float32)
    else:
        p = max(1, min(int(num_parallel), _cdiv(N, 128)))
        tile, k_per_core, n_pad = _gram_plan(N, p, tile_n)
        if n_pad != N:
            # Zero-padded columns do not change A @ A^T.
            a = jnp.pad(a, ((0, 0), (0, n_pad - N)))

        # Explicit VMEM headroom sized from the (sublane-padded) double-buffered input tile;
        # v5e's scoped default is only 16 MiB.
        sub = 16 if stream_bf16 else 8
        block_bytes = _round_up(Tp, sub) * tile * (2 if stream_bf16 else 4)
        vmem_limit = int(min(60 * 2**20, max(32 * 2**20, 3 * block_bytes)))

        aug = pl.pallas_call(
            _aug_gram_kernel,
            out_shape=jax.ShapeDtypeStruct((p, Tp, Tp), jnp.float32),
            grid_spec=pltpu.PrefetchScalarGridSpec(
                num_scalar_prefetch=0,
                grid=(p, k_per_core),
                in_specs=[
                    pl.BlockSpec((Tp, tile),
                                 lambda pi, ki: (0, pi * k_per_core + ki)),
                ],
                out_specs=pl.BlockSpec((pl.Squeezed(), Tp, Tp),
                                       lambda pi, ki: (pi, 0, 0)),
            ),
            compiler_params=pltpu.CompilerParams(
                dimension_semantics=("parallel", "arbitrary"),
                vmem_limit_bytes=vmem_limit,
            ),
        )(a)
        aug = aug.sum(axis=0)  # combine per-core partial grams (tiny (Tp, Tp) op)

    gram = aug[:T, :T]   # theta^T theta
    rhs = aug[:T, T:Tp]  # theta^T dt
    if ridge:
        # Normal equations square the condition number; pass ridge>0 for ill-conditioned
        # DeePyMoD libraries.
        gram = gram + ridge * jnp.eye(T, dtype=gram.dtype)
    return jnp.linalg.solve(gram, rhs)  # (T_selected, 1)


# ----------------------------------------------------------------------------
# Constraint forward, mirroring the PyTorch module (first call -> all-True mask).
# ----------------------------------------------------------------------------
class ConstraintLeastSquares:
    def __init__(self, *, tile_n=65536, num_parallel=1, stream_bf16=False, ridge=0.0,
                 small_n_fallback=8192):
        self.sparsity_masks = None
        self.coeff_vectors = None
        self._tile_n = int(tile_n)
        self._num_parallel = int(num_parallel)
        self._stream_bf16 = bool(stream_bf16)
        self._ridge = float(ridge)
        self._small_n_fallback = int(small_n_fallback)

    def __call__(self, inputs):
        time_derivs, thetas = inputs  # (N, 1), (N, T)
        N, T = thetas.shape
        if self.sparsity_masks is None:
            # torch.ones(thetas.shape[1], dtype=torch.bool)
            self.sparsity_masks = jnp.ones((T,), dtype=bool)
        masks = self.sparsity_masks

        # apply_mask: data-dependent column gather done host-side on the concrete mask.
        # TODO(synk): an in-kernel dynamic column gather for traced/jitted masks is not
        # expressible as a static BlockSpec; it is handled in plain JAX/NumPy here (this
        # forces one device->host sync per call, same as torch boolean indexing).
        cols = np.flatnonzero(np.asarray(masks))
        if cols.size == T:
            sparse_thetas = thetas
        else:
            sparse_thetas = thetas[:, jnp.asarray(cols)]

        # fit: ordinary least squares via the fused (jitted) Pallas normal-equation kernel.
        coeff_vectors = least_squares_fit(
            sparse_thetas, time_derivs,
            tile_n=self._tile_n, num_parallel=self._num_parallel,
            stream_bf16=self._stream_bf16, ridge=self._ridge,
            small_n_fallback=self._small_n_fallback,
        )

        if coeff_vectors.shape[0] != T:
            # map_coeffs: scatter selected coefficients back into a (T, 1) vector.
            mapped = jnp.zeros((T, 1), dtype=coeff_vectors.dtype)
            self.coeff_vectors = mapped.at[jnp.asarray(cols)].set(coeff_vectors)
        else:
            self.coeff_vectors = coeff_vectors * masks.astype(coeff_vectors.dtype)[:, None]
        return self.coeff_vectors


if __name__ == "__main__":
    key = jax.random.PRNGKey(0)
    k1, k2, k3 = jax.random.split(key, 3)

    N, T = 2048, 8  # samples, library terms (small demo shapes)
    thetas = jax.random.normal(k1, (N, T), dtype=jnp.float32)
    true_coeffs = jax.random.normal(k2, (T, 1), dtype=jnp.float32)
    noise = 0.01 * jax.random.normal(k3, (N, 1), dtype=jnp.float32)
    time_derivs = thetas @ true_coeffs + noise  # (N, 1)

    ref = jnp.linalg.lstsq(thetas, time_derivs)[0]

    # --- Pallas path, multi-step reduction (small tile so grid k > 1 is exercised). -----
    constraint = ConstraintLeastSquares(small_n_fallback=0, tile_n=512)

    # First call: all-True mask (matches the PyTorch module's first-call semantics).
    coeffs = jax.block_until_ready(constraint((time_derivs, thetas)))
    assert coeffs.shape == (T, 1)
    assert bool(jnp.all(jnp.isfinite(coeffs)))
    assert bool(jnp.allclose(coeffs, ref, atol=1e-2, rtol=1e-2))

    # Second call with a genuinely sparse mask exercises apply_mask / map_coeffs.
    sparse_mask = jnp.array([True, False, True, True, False, True, False, True])
    constraint.sparsity_masks = sparse_mask
    coeffs_sparse = jax.block_until_ready(constraint((time_derivs, thetas)))
    assert coeffs_sparse.shape == (T, 1)
    sel = np.flatnonzero(np.asarray(sparse_mask))
    ref_sparse = jnp.linalg.lstsq(thetas[:, sel], time_derivs)[0]
    assert bool(jnp.allclose(coeffs_sparse[sel], ref_sparse, atol=1e-2, rtol=1e-2))
    assert bool(jnp.all(coeffs_sparse[np.flatnonzero(~np.asarray(sparse_mask))] == 0.0))

    # --- Pallas path with a parallel (megacore-style) split of the sample axis. ---------
    constraint_p2 = ConstraintLeastSquares(small_n_fallback=0, tile_n=256, num_parallel=2)
    coeffs_p2 = jax.block_until_ready(constraint_p2((time_derivs, thetas)))
    assert bool(jnp.allclose(coeffs_p2, ref, atol=1e-2, rtol=1e-2))

    # --- Small-N fallback path (default threshold > N -> plain jnp) must agree. ---------
    constraint_fb = ConstraintLeastSquares()
    coeffs_fb = jax.block_until_ready(constraint_fb((time_derivs, thetas)))
    assert bool(jnp.allclose(coeffs_fb, coeffs, atol=1e-4, rtol=1e-4))

    print("KERNEL_OK")
</pallas_src>

<mosaic_0001>
module attributes {stable_mosaic.version = 11 : i64} {
  func.func @_aug_gram_kernel(%arg0: i32, %arg1: i32, %arg2: memref<9x512xf32, #tpu.memory_space<vmem>>, %arg3: memref<1x9x9xf32, #tpu.memory_space<vmem>>) attributes {dimension_semantics = [#tpu.dimension_semantics<parallel>, #tpu.dimension_semantics<arbitrary>], iteration_bounds = array<i64: 1, 4>, scalar_prefetch = 0 : i64, scratch_operands = 0 : i64, tpu.core_type = #tpu.core_type<tc>, window_params = [{transform_indices = @transform_0, window_bounds = array<i64: 9, 512>}, {transform_indices = @transform_1, window_bounds = array<i64: 1, 9, 9>}]} {
    %c0_i32 = arith.constant 0 : i32
    %0 = arith.cmpi eq, %arg1, %c0_i32 : i32
    %1 = arith.extui %0 : i1 to i32
    %c0_i32_0 = arith.constant 0 : i32
    %2 = arith.cmpi ne, %1, %c0_i32_0 : i32
    scf.if %2 {
      %cst_8 = arith.constant 0.000000e+00 : f32
      %11 = vector.broadcast %cst_8 : f32 to vector<9x9xf32>
      %c0_9 = arith.constant 0 : index
      %c0_10 = arith.constant 0 : index
      %c0_11 = arith.constant 0 : index
      %12 = vector.load %arg3[%c0_9, %c0_10, %c0_11] : memref<1x9x9xf32, #tpu.memory_space<vmem>>, vector<1x9x9xf32>
      %13 = vector.shape_cast %12 : vector<1x9x9xf32> to vector<9x9xf32>
      %14 = vector.shape_cast %11 : vector<9x9xf32> to vector<1x9x9xf32>
      tpu.vector_store %arg3[%c0_9, %c0_10, %c0_11], %14 {strides = array<i32>} : memref<1x9x9xf32, #tpu.memory_space<vmem>>, vector<1x9x9xf32>,
    } else {
    }
    %c0 = arith.constant 0 : index
    %c0_1 = arith.constant 0 : index
    %3 = vector.load %arg2[%c0, %c0_1] : memref<9x512xf32, #tpu.memory_space<vmem>>, vector<9x512xf32>
    %c0_2 = arith.constant 0 : index
    %c0_3 = arith.constant 0 : index
    %c0_4 = arith.constant 0 : index
    %4 = vector.load %arg3[%c0_2, %c0_3, %c0_4] : memref<1x9x9xf32, #tpu.memory_space<vmem>>, vector<1x9x9xf32>
    %5 = vector.shape_cast %4 : vector<1x9x9xf32> to vector<9x9xf32>
    %cst = arith.constant dense<0.000000e+00> : vector<9x9xf32>
    %6 = tpu.matmul %3, %3, %cst {dimension_numbers = #tpu.dot_dimension_numbers<[1], [1], [0], [0], [0, 0, 1, 0], [], []>} : vector<9x512xf32>, vector<9x512xf32>, vector<9x9xf32> -> vector<9x9xf32>
    %7 = arith.addf %5, %6 : vector<9x9xf32>
    %c0_5 = arith.constant 0 : index
    %c0_6 = arith.constant 0 : index
    %c0_7 = arith.constant 0 : index
    %8 = vector.load %arg3[%c0_5, %c0_6, %c0_7] : memref<1x9x9xf32, #tpu.memory_space<vmem>>, vector<1x9x9xf32>
    %9 = vector.shape_cast %8 : vector<1x9x9xf32> to vector<9x9xf32>
    %10 = vector.shape_cast %7 : vector<9x9xf32> to vector<1x9x9xf32>
    tpu.vector_store %arg3[%c0_5, %c0_6, %c0_7], %10 {strides = array<i32>} : memref<1x9x9xf32, #tpu.memory_space<vmem>>, vector<1x9x9xf32>,
    return
  }
  func.func @transform_0(%arg0: i32, %arg1: i32) -> (i32, i32) {
    %c4_i32 = arith.constant 4 : i32
    %0 = arith.muli %arg0, %c4_i32 : i32
    %1 = arith.addi %0, %arg1 : i32
    %c0_i32 = arith.constant 0 : i32
    %c0_i32_0 = arith.constant 0 : i32
    return %c0_i32, %1 : i32, i32
  }
  func.func @transform_1(%arg0: i32, %arg1: i32) -> (i32, i32, i32) {
    %c0_i32 = arith.constant 0 : i32
    %c0_i32_0 = arith.constant 0 : i32
    %c0_i32_1 = arith.constant 0 : i32
    return %arg0, %c0_i32, %c0_i32_0 : i32, i32, i32
  }
}

</mosaic_0001>

<llo_original>
// kernel: custom-call.8
$region0: #{custom-call.8}
  %s0 = inlined_call_operand.vmem [shape: f32[8,8], index: 0, kind: input, shape index: {}]
  %s1 = inlined_call_operand.vmem [shape: f32[8,8], index: 1, kind: output, shape index: {0}]
  %s2 = inlined_call_operand.hbm [shape: s32[8], index: 2, kind: output, shape index: {1}]
  %s3 = inlined_call_operand.vmem [shape: s32[8], index: 3, kind: output, shape index: {2}]
  %4 = xla_tuple %s1, %s2, %s3
  $region1: #{custom-call.8} parent=0
    #allocation0 [shape = 'u8[4096]{0}', space=vmem, size = 0x1000, scoped, tag = 'operand span for operand 0']
    #allocation1 [shape = 'u8[4096]{0}', space=vmem, size = 0x1000, scoped, tag = 'operand span for operand 1']
    #allocation2 [shape = 'u8[4096]{0}', space=vmem, size = 0x1000, scoped, tag = 'operand span for operand 2']
    #allocation3 [shape = 'u8[512]{0}', space=vmem, size = 0x400, scoped, tag = 'packed  for operand 2']
    #allocation4 [shape = 's32[1]{0}', space=sflag, size = 0x4, scoped, tag = 'scoped memory for custom-call.8']
    #allocation5 [shape = 'u8[4096]{0}', space=vmem, size = 0x1000, scoped, tag = 'operand span for operand 3']
    #allocation6 [shape = 'u8[512]{0}', space=vmem, size = 0x400, scoped, tag = 'packed  for operand 3']
    #allocation7 [shape = 's32[8,128]{1,0}', space=vmem, size = 0x1000, scoped, tag = 'scratch for permutations']
    %5 = vsyncpa [#allocation4], 0
    // Predicated region
    $region2: #{custom-call.8} parent=1 // pred_check
      _
    $region3: #{custom-call.8} parent=1 // pred_check_branch
      %7 = sbr.rel (0) target = $region5
    $region4: #{custom-call.8} parent=1 // pred_region
      %p9 = scmp.gt.s32.totalorder 1, 0
      // Predicated region
      $region6: #{custom-call.8} parent=4 // pred_check
        %p10 = pneg %p9
      $region7: #{custom-call.8} parent=4 // pred_check_branch
        %12 = sbr.rel (%p10) target = $region9
      $region8: #{custom-call.8} parent=4 // pred_region
        %s13 = ssub.s32 1, 1
        %s14 = smul.u32 %s13, 8
        %s15 = scalar_lea.vmem %s0, %s14
        %v16 = vld [vmem:[%s0] sm:$0xff]
        // While loop
        $region10: #{custom-call.8} parent=8 // loop_pre_header
          _
        $region11: #{custom-call.8} parent=8 // loop_header
          %s17 = sphi %s0, %s39
          %s18 = sphi [#allocation0], %s40
          %v19 = vphi %v16, %v41
          %s20 = ssub.s32 %s15, 64
          %p21 = scmp.gt.s32.totalorder %s17, %s20
        $region12: #{custom-call.8} parent=8 // loop_header_branch
          %23 = sbr.rel (%p21) target = $region16
        $region13: #{custom-call.8} parent=8 // loop_body
          %24 = vst [vmem:[%s18] sm:$0xff] %v19
          %v25 = vld [vmem:[%s17 + $0x8] sm:$0xff]
          %26 = vst [vmem:[%s18 + $0x8] sm:$0xff] %v25
          %v27 = vld [vmem:[%s17 + $0x10] sm:$0xff]
          %28 = vst [vmem:[%s18 + $0x10] sm:$0xff] %v27
          %v29 = vld [vmem:[%s17 + $0x18] sm:$0xff]
          %30 = vst [vmem:[%s18 + $0x18] sm:$0xff] %v29
          %v31 = vld [vmem:[%s17 + $0x20] sm:$0xff]
          %32 = vst [vmem:[%s18 + $0x20] sm:$0xff] %v31
          %v33 = vld [vmem:[%s17 + $0x28] sm:$0xff]
          %34 = vst [vmem:[%s18 + $0x28] sm:$0xff] %v33
          %v35 = vld [vmem:[%s17 + $0x30] sm:$0xff]
          %36 = vst [vmem:[%s18 + $0x30] sm:$0xff] %v35
          %v37 = vld [vmem:[%s17 + $0x38] sm:$0xff]
          %38 = vst [vmem:[%s18 + $0x38] sm:$0xff] %v37
        $region14: #{custom-call.8} parent=8 // loop_footer
          %s39 = scalar_lea.vmem %s17, 64
          %s40 = scalar_lea.vmem %s18, 64
          %v41 = vld [vmem:[%s17 + $0x40] sm:$0xff]
        $region15: #{custom-call.8} parent=8 // loop_footer_branch
          %42 = sbr.rel target = $region11
        $region16: #{custom-call.8} parent=8 // loop_exit
          _
        // While loop
        $region17: #{custom-call.8} parent=8 // loop_pre_header
          _
        $region18: #{custom-call.8} parent=8 // loop_header
          %s43 = sphi %s17, %s51
          %s44 = sphi %s18, %s52
          %v45 = vphi %v19, %v45
          %p46 = scmp.gt.s32.totalorder %s43, %s15
        $region19: #{custom-call.8} parent=8 // loop_header_branch
          %48 = sbr.rel (%p46) target = $region23
        $region20: #{custom-call.8} parent=8 // loop_body
          %v49 = vld [vmem:[%s43] sm:$0xff]
          %50 = vst [vmem:[%s44] sm:$0xff] %v49
        $region21: #{custom-call.8} parent=8 // loop_footer
          %s51 = scalar_lea.vmem %s43, 8
          %s52 = scalar_lea.vmem %s44, 8
        $region22: #{custom-call.8} parent=8 // loop_footer_branch
          %53 = sbr.rel target = $region18
        $region23: #{custom-call.8} parent=8 // loop_exit
          _
      $region9: #{custom-call.8} parent=4 // pred_fallthru
        _
      %s55 = ssub.s32 1, 1
      %s56 = smul.u32 1, 8
      %s57 = scalar_lea.vmem [#allocation0], %s56
      %s58 = smul.u32 1, 8
      %s59 = scalar_lea.vmem %s0, %s58
      %v60 = vld [vmem:[%s59] sm:%s55]
      %61 = vst [vmem:[%s57] sm:%s55] %v60
    $region5: #{custom-call.8} parent=1 // pred_fallthru
      _
    %v62 = vld [vmem:[#allocation0] sm:$0xff]
    %63 = vst [vmem:[#allocation1] sm:$0xff] %v62
    %64 = vst [vmem:[#allocation2] sm:$0x1] 0
    %v65 = vlaneseq
    %v66 = vshrl.u32 %v65, 7
    %v67 = vmov %v66
    %69 = vst [vmem:[#allocation7] sm:$0xff] %v67
    loop: start=0, step=1, limit=8
    $region25: #{custom-call.8} parent=1 // loop_pre_header
      _
    $region26: #{custom-call.8} parent=1 // loop_header
      %s71 = sphi 0, %s75
      %p72 = scmp.ge.s32.totalorder %s71, 8
    $region27: #{custom-call.8} parent=1 // loop_header_branch
      %74 = sbr.rel (%p72) target = $region31
    $region28: #{custom-call.8} parent=1 // loop_body
      %v76 = vstv %s71
      %v77 = vlaneseq
      %v78 = vshrl.u32 %v77, 7
      %v79 = vmov %v78
      %v80 = vld [vmem:[#allocation1] sm:$0xff]
      %v81 = vand.u32 2147483647, %v80
      %v83 = vstv %s71
      %vm84 = vcmp.ge.s32.totalorder %v79, %v83
      %vm85 = vcmp.lt.s32.totalorder %v79, 8
      %vm86 = vmand %vm84, %vm85
      %vm87 = vcmp.lt.f32.partialorder -inf, %v81
      %vm88 = vmand %vm86, %vm87
      %v89 = vsel %vm88, %v79, %v76
      %v90 = vsel %vm88, %v81, -inf
      %v91 = vrot.slane %v90, 1
      %v92 = vrot.slane %v89, 1
      %vm93 = vcmp.ge.f32.partialorder %v91, %v90
      %v94 = vsel %vm93, %v91, %v90
      %v95 = vsel %vm93, %v92, %v89
      %v96 = vrot.slane %v91, 1
      %v97 = vrot.slane %v92, 1
      %vm98 = vcmp.ge.f32.partialorder %v96, %v94
      %v99 = vsel %vm98, %v96, %v94
      %v100 = vsel %vm98, %v97, %v95
      %v101 = vrot.slane %v96, 1
      %v102 = vrot.slane %v97, 1
      %vm103 = vcmp.ge.f32.partialorder %v101, %v99
      %v104 = vsel %vm103, %v101, %v99
      %v105 = vsel %vm103, %v102, %v100
      %v106 = vrot.slane %v101, 1
      %v107 = vrot.slane %v102, 1
      %vm108 = vcmp.ge.f32.partialorder %v106, %v104
      %v109 = vsel %vm108, %v106, %v104
      %v110 = vsel %vm108, %v107, %v105
      %v111 = vrot.slane %v106, 1
      %v112 = vrot.slane %v107, 1
      %vm113 = vcmp.ge.f32.partialorder %v111, %v109
      %v114 = vsel %vm113, %v111, %v109
      %v115 = vsel %vm113, %v112, %v110
      %v116 = vrot.slane %v111, 1
      %v117 = vrot.slane %v112, 1
      %vm118 = vcmp.ge.f32.partialorder %v116, %v114
      %v119 = vsel %vm118, %v116, %v114
      %v120 = vsel %vm118, %v117, %v115
      %v121 = vrot.slane %v116, 1
      %v122 = vrot.slane %v117, 1
      %vm123 = vcmp.ge.f32.partialorder %v121, %v119
      %v124 = vsel %vm123, %v121, %v119
      %v125 = vsel %vm123, %v122, %v120
      %s126 = ssub.s32 128, %s71
      %127 = vrot.lane.b32.xlu0 %v125, %s126
      %v128 = vpop.permute.xlu0 %127
      %s129 = vtos %v128
      %v130 = vstv %s71
      %v131 = vlaneseq
      %v132 = vand.u32 %v131, 127
      %vm133 = vcmp.eq.s32.totalorder %v132, %v130
      %v134 = vstv %s129
      %v135 = vld [vmem:[#allocation2] ss:$0 sm:$0xff]
      %v136 = vsel %vm133, %v134, %v135
      %137 = vst [vmem:[#allocation2] sm:$0x1] %v136
      %s138 = scalar_lea.vmem [#allocation1], %s71
      %s139 = scalar_lea.vmem [#allocation1], %s129
      %v140 = vld [vmem:[%s138] ss:$0 sm:$0xff]
      %v141 = vld [vmem:[%s139] ss:$0 sm:$0xff]
      %142 = vst [vmem:[%s139] sm:$0x1] %v140
      %143 = vst [vmem:[%s138] sm:$0x1] %v141
      %s144 = scalar_lea.vmem [#allocation7], %s71
      %s145 = scalar_lea.vmem [#allocation7], %s129
      %v146 = vld [vmem:[%s144] ss:$0 sm:$0xff]
      %v147 = vld [vmem:[%s145] ss:$0 sm:$0xff]
      %148 = vst [vmem:[%s145] sm:$0x1] %v146
      %149 = vst [vmem:[%s144] sm:$0x1] %v147
      %vm150 = vcmp.ne.f32.partialorder %v141, 0.0
      %vm151 = vmand %vm133, %vm150
      %v152 = vsel %vm151, %v141, 1.0
      %v153 = vlaneseq
      %v154 = vand.u32 %v153, 127
      %v155 = vstv %s71
      %vm156 = vcmp.gt.s32.totalorder %v154, %v155
      %v157 = vsel %vm156, %v141, 0.0
      %v158 = vlaneseq
      %v159 = vshrl.u32 %v158, 7
      %v160 = vmov %v159
      %v161 = vld [vmem:[#allocation1] sm:$0xff]
      %v163 = vstv %s71
      %vm164 = vcmp.gt.s32.totalorder %v160, %v163
      %v165 = vsel %vm164, %v152, 1.0
      %v166 = vrcp.pop %v165
      %v167 = vmul.f32 %v165, %v166
      %v168 = vsub.f32 1.0, %v167
      %v169 = vmul.f32 %v166, %v168
      %v170 = vadd.f32 %v166, %v169
      %vm171 = vweird.f32 %v165
      %vm172 = vweird.f32 %v166
      %vm173 = vmor %vm171, %vm172
      %v174 = vsel %vm173, %v166, %v170
      %v175 = vand.u32 2147483647, %v165
      %vm176 = vcmp.eq.f32.partialorder %v175, 8.507059e+37
      %v177 = vand.u32 %v165, 2147483648
      %v178 = vor.u32 1.1754944e-38, %v177
      %v179 = vsel %vm176, %v178, %v174
      %v180 = vmul.f32 %v161, %v179
      %vm181 = vmand %vm164, %vm133
      %v182 = vsel %vm181, %v180, 0.0
      %183 = vadd.xlane.f32.xlu0 %v182
      %v184 = vpop.xlane.xlu0 %183
      %v185 = vmul.f32 %v184, %v157
      %v186 = vsub.f32 %v180, %v185
      %187 = vst [vmem:[#allocation1] sm:$0xff] %v186
    $region29: #{custom-call.8} parent=1 // loop_footer
      %s75 = sadd.s32 1, %s71
    $region30: #{custom-call.8} parent=1 // loop_footer_branch
      %70 = sbr.rel target = $region26
    $region31: #{custom-call.8} parent=1 // loop_exit
      _
    %v188 = vld [vmem:[#allocation7] sm:$0xff]
    %s189 = scalar_lea.vmem [#allocation7], 8
    %s190 = scalar_lea.vmem [#allocation7], 16
    %s191 = scalar_lea.vmem [#allocation7], 24
    %s192 = scalar_lea.vmem [#allocation7], 32
    %s193 = scalar_lea.vmem [#allocation7], 40
    %s194 = scalar_lea.vmem [#allocation7], 48
    %s195 = scalar_lea.vmem [#allocation7], 56
    %s196 = scalar_lea.vmem [#allocation7], 64
    %s197 = scalar_lea.vmem [#allocation7], 72
    %s198 = scalar_lea.vmem [#allocation7], 80
    %s199 = scalar_lea.vmem [#allocation7], 88
    %s200 = scalar_lea.vmem [#allocation7], 96
    %s201 = scalar_lea.vmem [#allocation7], 104
    %s202 = scalar_lea.vmem [#allocation7], 112
    %s203 = scalar_lea.vmem [#allocation7], 120
    %204 = vxpose.xlu0.b32.start [1/16] %v188, 128
    %205 = vxpose.xlu0.b32.cont [2/16] 0, 128
    %206 = vxpose.xlu0.b32.cont [3/16] 0, 128
    %207 = vxpose.xlu0.b32.cont [4/16] 0, 128
    %208 = vxpose.xlu0.b32.cont [5/16] 0, 128
    %209 = vxpose.xlu0.b32.cont [6/16] 0, 128
    %210 = vxpose.xlu0.b32.cont [7/16] 0, 128
    %211 = vxpose.xlu0.b32.cont [8/16] 0, 128
    %212 = vxpose.xlu0.b32.cont [9/16] 0, 128
    %213 = vxpose.xlu0.b32.cont [10/16] 0, 128
    %214 = vxpose.xlu0.b32.cont [11/16] 0, 128
    %215 = vxpose.xlu0.b32.cont [12/16] 0, 128
    %216 = vxpose.xlu0.b32.cont [13/16] 0, 128
    %217 = vxpose.xlu0.b32.cont [14/16] 0, 128
    %218 = vxpose.xlu0.b32.cont [15/16] 0, 128
    %219 = vxpose.xlu0.b32.end [16/16] 0, 128
    %v220 = vpop.trf.xlu0
    %v221 = vpop.trf.xlu0
    %v222 = vpop.trf.xlu0
    %v223 = vpop.trf.xlu0
    %v224 = vpop.trf.xlu0
    %v225 = vpop.trf.xlu0
    %v226 = vpop.trf.xlu0
    %v227 = vpop.trf.xlu0
    %v228 = vpop.trf.xlu0
    %v229 = vpop.trf.xlu0
    %v230 = vpop.trf.xlu0
    %v231 = vpop.trf.xlu0
    %v232 = vpop.trf.xlu0
    %v233 = vpop.trf.xlu0
    %v234 = vpop.trf.xlu0
    %v235 = vpop.trf.xlu0
    %236 = vst [vmem:[#allocation5] sm:$0x1] %v220
    %s238 = ssub.s32 2, 1
    %v239 = vld [vmem:[#allocation2] sm:%s238]
    %s241 = ssub.s32 2, 1
    %242 = vst [vmem:[#allocation3] sm:%s241] %v239
    %s244 = ssub.s32 2, 1
    %v245 = vld [vmem:[#allocation5] sm:%s244]
    %s247 = ssub.s32 2, 1
    %248 = vst [vmem:[#allocation6] sm:%s247] %v245
    // Predicated region
    $region32: #{custom-call.8} parent=1 // pred_check
      _
    $region33: #{custom-call.8} parent=1 // pred_check_branch
      %250 = sbr.rel (0) target = $region35
    $region34: #{custom-call.8} parent=1 // pred_region
      %p252 = scmp.gt.s32.totalorder 1, 0
      // Predicated region
      $region36: #{custom-call.8} parent=34 // pred_check
        %p253 = pneg %p252
      $region37: #{custom-call.8} parent=34 // pred_check_branch
        %255 = sbr.rel (%p253) target = $region39
      $region38: #{custom-call.8} parent=34 // pred_region
        %s256 = ssub.s32 1, 1
        %s257 = smul.u32 %s256, 8
        %s258 = scalar_lea.vmem [#allocation1], %s257
        %v259 = vld [vmem:[#allocation1] sm:$0xff]
        // While loop
        $region40: #{custom-call.8} parent=38 // loop_pre_header
          _
        $region41: #{custom-call.8} parent=38 // loop_header
          %s260 = sphi [#allocation1], %s282
          %s261 = sphi %s1, %s283
          %v262 = vphi %v259, %v284
          %s263 = ssub.s32 %s258, 64
          %p264 = scmp.gt.s32.totalorder %s260, %s263
        $region42: #{custom-call.8} parent=38 // loop_header_branch
          %266 = sbr.rel (%p264) target = $region46
        $region43: #{custom-call.8} parent=38 // loop_body
          %267 = vst [vmem:[%s261] sm:$0xff] %v262
          %v268 = vld [vmem:[%s260 + $0x8] sm:$0xff]
          %269 = vst [vmem:[%s261 + $0x8] sm:$0xff] %v268
          %v270 = vld [vmem:[%s260 + $0x10] sm:$0xff]
          %271 = vst [vmem:[%s261 + $0x10] sm:$0xff] %v270
          %v272 = vld [vmem:[%s260 + $0x18] sm:$0xff]
          %273 = vst [vmem:[%s261 + $0x18] sm:$0xff] %v272
          %v274 = vld [vmem:[%s260 + $0x20] sm:$0xff]
          %275 = vst [vmem:[%s261 + $0x20] sm:$0xff] %v274
          %v276 = vld [vmem:[%s260 + $0x28] sm:$0xff]
          %277 = vst [vmem:[%s261 + $0x28] sm:$0xff] %v276
          %v278 = vld [vmem:[%s260 + $0x30] sm:$0xff]
          %279 = vst [vmem:[%s261 + $0x30] sm:$0xff] %v278
          %v280 = vld [vmem:[%s260 + $0x38] sm:$0xff]
          %281 = vst [vmem:[%s261 + $0x38] sm:$0xff] %v280
        $region44: #{custom-call.8} parent=38 // loop_footer
          %s282 = scalar_lea.vmem %s260, 64
          %s283 = scalar_lea.vmem %s261, 64
          %v284 = vld [vmem:[%s260 + $0x40] sm:$0xff]
        $region45: #{custom-call.8} parent=38 // loop_footer_branch
          %285 = sbr.rel target = $region41
        $region46: #{custom-call.8} parent=38 // loop_exit
          _
        // While loop
        $region47: #{custom-call.8} parent=38 // loop_pre_header
          _
        $region48: #{custom-call.8} parent=38 // loop_header
          %s286 = sphi %s260, %s294
          %s287 = sphi %s261, %s295
          %v288 = vphi %v262, %v288
          %p289 = scmp.gt.s32.totalorder %s286, %s258
        $region49: #{custom-call.8} parent=38 // loop_header_branch
          %291 = sbr.rel (%p289) target = $region53
        $region50: #{custom-call.8} parent=38 // loop_body
          %v292 = vld [vmem:[%s286] sm:$0xff]
          %293 = vst [vmem:[%s287] sm:$0xff] %v292
        $region51: #{custom-call.8} parent=38 // loop_footer
          %s294 = scalar_lea.vmem %s286, 8
          %s295 = scalar_lea.vmem %s287, 8
        $region52: #{custom-call.8} parent=38 // loop_footer_branch
          %296 = sbr.rel target = $region48
        $region53: #{custom-call.8} parent=38 // loop_exit
          _
      $region39: #{custom-call.8} parent=34 // pred_fallthru
        _
      %s298 = ssub.s32 1, 1
      %s299 = smul.u32 1, 8
      %s300 = scalar_lea.vmem %s1, %s299
      %s301 = smul.u32 1, 8
      %s302 = scalar_lea.vmem [#allocation1], %s301
      %v303 = vld [vmem:[%s302] sm:%s298]
      %304 = vst [vmem:[%s300] sm:%s298] %v303
    $region35: #{custom-call.8} parent=1 // pred_fallthru
      _
    // Predicated region
    $region54: #{custom-call.8} parent=1 // pred_check
      _
    $region55: #{custom-call.8} parent=1 // pred_check_branch
      %306 = sbr.rel (0) target = $region57
    $region56: #{custom-call.8} parent=1 // pred_region
      %308 = vsyncadd [#allocation4], 0
      %s310 = sshll.u32 [#allocation3], 4
      %s311 = int_to_ptr.vmem [resolvable:$true] %s310
      %s312 = sshll.u32 %s2, 4
      %s313 = int_to_ptr.hbm [resolvable:$true] %s312
      %315 = dma.vmem_to_hbm [thread:$0]  %s311, 16, %s313, [#allocation4]
    $region57: #{custom-call.8} parent=1 // pred_fallthru
      _
    // Predicated region
    $region58: #{custom-call.8} parent=1 // pred_check
      _
    $region59: #{custom-call.8} parent=1 // pred_check_branch
      %317 = sbr.rel (0) target = $region61
    $region60: #{custom-call.8} parent=1 // pred_region
      // Predicated region
      $region62: #{custom-call.8} parent=60 // pred_check
        _
      $region63: #{custom-call.8} parent=60 // pred_check_branch
        %319 = sbr.rel (0) target = $region65
      $region64: #{custom-call.8} parent=60 // pred_region
        %p321 = scmp.gt.s32.totalorder 0, 0
        // Predicated region
        $region66: #{custom-call.8} parent=64 // pred_check
          %p322 = pneg %p321
        $region67: #{custom-call.8} parent=64 // pred_check_branch
          %324 = sbr.rel (%p322) target = $region69
        $region68: #{custom-call.8} parent=64 // pred_region
          %s325 = ssub.s32 0, 1
          %s326 = smul.u32 %s325, 8
          %s327 = scalar_lea.vmem [#allocation6], %s326
          %v328 = vld [vmem:[#allocation6] sm:$0xff]
          // While loop
          $region70: #{custom-call.8} parent=68 // loop_pre_header
            _
          $region71: #{custom-call.8} parent=68 // loop_header
            %s329 = sphi [#allocation6], %s351
            %s330 = sphi %s3, %s352
            %v331 = vphi %v328, %v353
            %s332 = ssub.s32 %s327, 64
            %p333 = scmp.gt.s32.totalorder %s329, %s332
          $region72: #{custom-call.8} parent=68 // loop_header_branch
            %335 = sbr.rel (%p333) target = $region76
          $region73: #{custom-call.8} parent=68 // loop_body
            %336 = vst [vmem:[%s330] sm:$0xff] %v331
            %v337 = vld [vmem:[%s329 + $0x8] sm:$0xff]
            %338 = vst [vmem:[%s330 + $0x8] sm:$0xff] %v337
            %v339 = vld [vmem:[%s329 + $0x10] sm:$0xff]
            %340 = vst [vmem:[%s330 + $0x10] sm:$0xff] %v339
            %v341 = vld [vmem:[%s329 + $0x18] sm:$0xff]
            %342 = vst [vmem:[%s330 + $0x18] sm:$0xff] %v341
            %v343 = vld [vmem:[%s329 + $0x20] sm:$0xff]
            %344 = vst [vmem:[%s330 + $0x20] sm:$0xff] %v343
            %v345 = vld [vmem:[%s329 + $0x28] sm:$0xff]
            %346 = vst [vmem:[%s330 + $0x28] sm:$0xff] %v345
            %v347 = vld [vmem:[%s329 + $0x30] sm:$0xff]
            %348 = vst [vmem:[%s330 + $0x30] sm:$0xff] %v347
            %v349 = vld [vmem:[%s329 + $0x38] sm:$0xff]
            %350 = vst [vmem:[%s330 + $0x38] sm:$0xff] %v349
          $region74: #{custom-call.8} parent=68 // loop_footer
            %s351 = scalar_lea.vmem %s329, 64
            %s352 = scalar_lea.vmem %s330, 64
            %v353 = vld [vmem:[%s329 + $0x40] sm:$0xff]
          $region75: #{custom-call.8} parent=68 // loop_footer_branch
            %354 = sbr.rel target = $region71
          $region76: #{custom-call.8} parent=68 // loop_exit
            _
          // While loop
          $region77: #{custom-call.8} parent=68 // loop_pre_header
            _
          $region78: #{custom-call.8} parent=68 // loop_header
            %s355 = sphi %s329, %s363
            %s356 = sphi %s330, %s364
            %v357 = vphi %v331, %v357
            %p358 = scmp.gt.s32.totalorder %s355, %s327
          $region79: #{custom-call.8} parent=68 // loop_header_branch
            %360 = sbr.rel (%p358) target = $region83
          $region80: #{custom-call.8} parent=68 // loop_body
            %v361 = vld [vmem:[%s355] sm:$0xff]
            %362 = vst [vmem:[%s356] sm:$0xff] %v361
          $region81: #{custom-call.8} parent=68 // loop_footer
            %s363 = scalar_lea.vmem %s355, 8
            %s364 = scalar_lea.vmem %s356, 8
          $region82: #{custom-call.8} parent=68 // loop_footer_branch
            %365 = sbr.rel target = $region78
          $region83: #{custom-call.8} parent=68 // loop_exit
            _
        $region69: #{custom-call.8} parent=64 // pred_fallthru
          _
        %s367 = ssub.s32 2, 1
        %s368 = smul.u32 0, 8
        %s369 = scalar_lea.vmem %s3, %s368
        %s370 = smul.u32 0, 8
        %s371 = scalar_lea.vmem [#allocation6], %s370
        %v372 = vld [vmem:[%s371] sm:%s367]
        %373 = vst [vmem:[%s369] sm:%s367] %v372
      $region65: #{custom-call.8} parent=60 // pred_fallthru
        _
    $region61: #{custom-call.8} parent=1 // pred_fallthru
      _
    // Predicated region
    $region84: #{custom-call.8} parent=1 // pred_check
      _
    $region85: #{custom-call.8} parent=1 // pred_check_branch
      %375 = sbr.rel (0) target = $region87
    $region86: #{custom-call.8} parent=1 // pred_region
      %377 = dma.done [#allocation4], 16
    $region87: #{custom-call.8} parent=1 // pred_fallthru
      _
    // Predicated region
    $region88: #{custom-call.8} parent=1 // pred_check
      _
    $region89: #{custom-call.8} parent=1 // pred_check_branch
      %379 = sbr.rel (0) target = $region91
    $region90: #{custom-call.8} parent=1 // pred_region
      _
    $region91: #{custom-call.8} parent=1 // pred_fallthru
      _
    %380 = vsyncpa [#allocation4], 1

// kernel: custom-call.10
$region0: #{custom-call.10}
  %s0 = inlined_call_operand.vmem [shape: f32[1,8,8], index: 0, kind: input, shape index: {}]
  %s1 = inlined_call_operand.vmem [shape: f32[1,8,8], index: 1, kind: output, shape index: {}]
  $region1: #{custom-call.10} parent=0
    #allocation0 [shape = 'u8[4096]{0}', space=vmem, size = 0x1000, scoped, tag = 'operand span for operand 0']
    #allocation1 [shape = 'u8[4096]{0}', space=vmem, size = 0x1000, scoped, tag = 'operand span for operand 1']
    #allocation2 [shape = 'f32[8,8]{1,0}', space=vmem, size = 0x1000, scoped, tag = 'rescaled input a']
    // Predicated region
    $region2: #{custom-call.10} parent=1 // pred_check
      _
    $region3: #{custom-call.10} parent=1 // pred_check_branch
      %3 = sbr.rel (0) target = $region5
    $region4: #{custom-call.10} parent=1 // pred_region
      // Predicated region
      $region6: #{custom-call.10} parent=4 // pred_check
        _
      $region7: #{custom-call.10} parent=4 // pred_check_branch
        %5 = sbr.rel (0) target = $region9
      $region8: #{custom-call.10} parent=4 // pred_region
        // Predicated region
        $region21: #{custom-call.10} parent=8 // pred_check
          _
        $region22: #{custom-call.10} parent=8 // pred_check_branch
          %21 = sbr.rel (0) target = $region24
        $region23: #{custom-call.10} parent=8 // pred_region
          loop: start=0, step=1, limit=1
          $region25: #{custom-call.10} parent=23 // loop_pre_header
            _
          $region26: #{custom-call.10} parent=23 // loop_header
            %s23 = sphi 0, %s27
            %p24 = scmp.ge.s32.totalorder %s23, 1
            %s28 = sphi %s0, %s0
            %s29 = sphi [#allocation0], [#allocation0]
          $region27: #{custom-call.10} parent=23 // loop_header_branch
            %26 = sbr.rel (%p24) target = $region31
          $region28: #{custom-call.10} parent=23 // loop_body
            %v30 = vld [vmem:[%s28] sm:$0xff]
            %31 = vst [vmem:[%s29] sm:$0xff] %v30
          $region29: #{custom-call.10} parent=23 // loop_footer
            %s27 = sadd.s32 1, %s23
          $region30: #{custom-call.10} parent=23 // loop_footer_branch
            %22 = sbr.rel target = $region26
          $region31: #{custom-call.10} parent=23 // loop_exit
            _
        $region24: #{custom-call.10} parent=8 // pred_fallthru
          _
        // Predicated region
        $region32: #{custom-call.10} parent=8 // pred_check
          _
        $region33: #{custom-call.10} parent=8 // pred_check_branch
          %33 = sbr.rel target = $region35
        $region34: #{custom-call.10} parent=8 // pred_region
          _
        $region35: #{custom-call.10} parent=8 // pred_fallthru
          _
      $region9: #{custom-call.10} parent=4 // pred_fallthru
        _
      // Predicated region
      $region10: #{custom-call.10} parent=4 // pred_check
        _
      $region11: #{custom-call.10} parent=4 // pred_check_branch
        %7 = sbr.rel target = $region13
      $region12: #{custom-call.10} parent=4 // pred_region
        %s9 = ssub.s32 256, 1
        loop: start=0, step=1, limit=1
        $region14: #{custom-call.10} parent=12 // loop_pre_header
          _
        $region15: #{custom-call.10} parent=12 // loop_header
          %s11 = sphi 0, %s15
          %p12 = scmp.ge.s32.totalorder %s11, 1
          %s16 = sphi %s0, %s0
          %s17 = sphi [#allocation0], [#allocation0]
        $region16: #{custom-call.10} parent=12 // loop_header_branch
          %14 = sbr.rel (%p12) target = $region20
        $region17: #{custom-call.10} parent=12 // loop_body
          %v18 = vld [vmem:[%s16] sm:%s9]
          %19 = vst [vmem:[%s17] sm:%s9] %v18
        $region18: #{custom-call.10} parent=12 // loop_footer
          %s15 = sadd.s32 1, %s11
        $region19: #{custom-call.10} parent=12 // loop_footer_branch
          %10 = sbr.rel target = $region15
        $region20: #{custom-call.10} parent=12 // loop_exit
          _
      $region13: #{custom-call.10} parent=4 // pred_fallthru
        _
    $region5: #{custom-call.10} parent=1 // pred_fallthru
      _
    %34 = vnop
    %v35 = vlaneseq
    %v36 = vand.u32 %v35, 127
    %vm37 = vcmp.lt.s32.totalorder %v36, 8
    %v38 = vlaneseq
    %v39 = vshrl.u32 %v38, 7
    %vm41 = vcmp.eq.s32.totalorder %v39, %v36
    %v42 = vld [vmem:[#allocation0] sm:$0xff]
    %v43 = vsel %vm41, %v42, 0.0
    %44 = vadd.xlane.f32.xlu0 %v43
    %v45 = vpop.xlane.xlu0 %44
    %vm46 = vcmp.ge.s32.totalorder %v39, %v36
    %vm47 = vmand %vm46, %vm37
    %v48 = vsel %vm47, %v42, 0.0
    %v49 = vrcp.pop %v45
    %v50 = vmul.f32 %v45, %v49
    %v51 = vsub.f32 1.0, %v50
    %v52 = vmul.f32 %v49, %v51
    %v53 = vadd.f32 %v49, %v52
    %vm54 = vweird.f32 %v45
    %vm55 = vweird.f32 %v49
    %vm56 = vmor %vm54, %vm55
    %v57 = vsel %vm56, %v49, %v53
    %v58 = vand.u32 2147483647, %v45
    %vm59 = vcmp.eq.f32.partialorder %v58, 8.507059e+37
    %v60 = vand.u32 %v45, 2147483648
    %v61 = vor.u32 1.1754944e-38, %v60
    %v62 = vsel %vm59, %v61, %v57
    %v63 = vmul.f32 %v48, %v62
    %64 = vst [vmem:[#allocation2] sm:$0xff] %v63
    %v65 = vlaneseq
    %v66 = vand.u32 %v65, 127
    %v67 = vlaneseq
    %v68 = vshrl.u32 %v67, 7
    %vm70 = vcmp.eq.s32.totalorder %v66, %v68
    %v71 = vlaneseq
    %v72 = vand.u32 %v71, 127
    %vm73 = vcmp.eq.s32.totalorder %v72, 0
    %v74 = vsel %vm73, 1.0, -1.0
    %v75 = vsel %vm70, %v74, 0.0
    %s76 = scalar_lea.vmem [#allocation2], 1
    %v77 = vld [vmem:[%s76] ss:$0 sm:$0xff]
    %v78 = vxor.u32 %v77, 2147483648
    %v79 = vlaneseq
    %v80 = vand.u32 %v79, 127
    %vm81 = vcmp.eq.s32.totalorder %v80, 1
    %v82 = vmul.f32 %v78, %v75
    %83 = vadd.xlane.f32.xlu0 %v82
    %v84 = vpop.xlane.xlu0 %83
    %v85 = vsel %vm81, %v84, %v75
    %s86 = scalar_lea.vmem [#allocation2], 2
    %v87 = vld [vmem:[%s86] ss:$0 sm:$0xff]
    %v88 = vxor.u32 %v87, 2147483648
    %v89 = vlaneseq
    %v90 = vand.u32 %v89, 127
    %vm91 = vcmp.eq.s32.totalorder %v90, 2
    %v92 = vmul.f32 %v88, %v85
    %93 = vadd.xlane.f32.xlu0 %v92
    %v94 = vpop.xlane.xlu0 %93
    %v95 = vsel %vm91, %v94, %v85
    %s96 = scalar_lea.vmem [#allocation2], 3
    %v97 = vld [vmem:[%s96] ss:$0 sm:$0xff]
    %v98 = vxor.u32 %v97, 2147483648
    %v99 = vlaneseq
    %v100 = vand.u32 %v99, 127
    %vm101 = vcmp.eq.s32.totalorder %v100, 3
    %v102 = vmul.f32 %v98, %v95
    %103 = vadd.xlane.f32.xlu0 %v102
    %v104 = vpop.xlane.xlu0 %103
    %v105 = vsel %vm101, %v104, %v95
    %s106 = scalar_lea.vmem [#allocation2], 4
    %v107 = vld [vmem:[%s106] ss:$0 sm:$0xff]
    %v108 = vxor.u32 %v107, 2147483648
    %v109 = vlaneseq
    %v110 = vand.u32 %v109, 127
    %vm111 = vcmp.eq.s32.totalorder %v110, 4
    %v112 = vmul.f32 %v108, %v105
    %113 = vadd.xlane.f32.xlu0 %v112
    %v114 = vpop.xlane.xlu0 %113
    %v115 = vsel %vm111, %v114, %v105
    %s116 = scalar_lea.vmem [#allocation2], 5
    %v117 = vld [vmem:[%s116] ss:$0 sm:$0xff]
    %v118 = vxor.u32 %v117, 2147483648
    %v119 = vlaneseq
    %v120 = vand.u32 %v119, 127
    %vm121 = vcmp.eq.s32.totalorder %v120, 5
    %v122 = vmul.f32 %v118, %v115
    %123 = vadd.xlane.f32.xlu0 %v122
    %v124 = vpop.xlane.xlu0 %123
    %v125 = vsel %vm121, %v124, %v115
    %s126 = scalar_lea.vmem [#allocation2], 6
    %v127 = vld [vmem:[%s126] ss:$0 sm:$0xff]
    %v128 = vxor.u32 %v127, 2147483648
    %v129 = vlaneseq
    %v130 = vand.u32 %v129, 127
    %vm131 = vcmp.eq.s32.totalorder %v130, 6
    %v132 = vmul.f32 %v128, %v125
    %133 = vadd.xlane.f32.xlu0 %v132
    %v134 = vpop.xlane.xlu0 %133
    %v135 = vsel %vm131, %v134, %v125
    %s136 = scalar_lea.vmem [#allocation2], 7
    %v137 = vld [vmem:[%s136] ss:$0 sm:$0xff]
    %v138 = vxor.u32 %v137, 2147483648
    %v139 = vlaneseq
    %v140 = vand.u32 %v139, 127
    %vm141 = vcmp.eq.s32.totalorder %v140, 7
    %v142 = vmul.f32 %v138, %v135
    %143 = vadd.xlane.f32.xlu0 %v142
    %v144 = vpop.xlane.xlu0 %143
    %v145 = vsel %vm141, %v144, %v135
    %v146 = vrcp.pop %v45
    %v147 = vmul.f32 %v45, %v146
    %v148 = vsub.f32 1.0, %v147
    %v149 = vmul.f32 %v146, %v148
    %v150 = vadd.f32 %v146, %v149
    %vm151 = vweird.f32 %v45
    %vm152 = vweird.f32 %v146
    %vm153 = vmor %vm151, %vm152
    %v154 = vsel %vm153, %v146, %v150
    %v155 = vand.u32 2147483647, %v45
    %vm156 = vcmp.eq.f32.partialorder %v155, 8.507059e+37
    %v157 = vand.u32 %v45, 2147483648
    %v158 = vor.u32 1.1754944e-38, %v157
    %v159 = vsel %vm156, %v158, %v154
    %v160 = vmul.f32 %v145, %v159
    %vm161 = vweird.f32 %v45
    %v162 = vsel %vm161, %v145, %v160
    %163 = vst [vmem:[#allocation1] sm:$0xff] %v162
    // Predicated region
    $region36: #{custom-call.10} parent=1 // pred_check
      _
    $region37: #{custom-call.10} parent=1 // pred_check_branch
      %165 = sbr.rel (0) target = $region39
    $region38: #{custom-call.10} parent=1 // pred_region
      // Predicated region
      $region40: #{custom-call.10} parent=38 // pred_check
        _
      $region41: #{custom-call.10} parent=38 // pred_check_branch
        %167 = sbr.rel (0) target = $region43
      $region42: #{custom-call.10} parent=38 // pred_region
        // Predicated region
        $region55: #{custom-call.10} parent=42 // pred_check
          _
        $region56: #{custom-call.10} parent=42 // pred_check_branch
          %183 = sbr.rel (0) target = $region58
        $region57: #{custom-call.10} parent=42 // pred_region
          loop: start=0, step=1, limit=1
          $region59: #{custom-call.10} parent=57 // loop_pre_header
            _
          $region60: #{custom-call.10} parent=57 // loop_header
            %s185 = sphi 0, %s189
            %p186 = scmp.ge.s32.totalorder %s185, 1
            %s190 = sphi [#allocation1], [#allocation1]
            %s191 = sphi %s1, %s1
          $region61: #{custom-call.10} parent=57 // loop_header_branch
            %188 = sbr.rel (%p186) target = $region65
          $region62: #{custom-call.10} parent=57 // loop_body
            %v192 = vld [vmem:[%s190] sm:$0xff]
            %193 = vst [vmem:[%s191] sm:$0xff] %v192
          $region63: #{custom-call.10} parent=57 // loop_footer
            %s189 = sadd.s32 1, %s185
          $region64: #{custom-call.10} parent=57 // loop_footer_branch
            %184 = sbr.rel target = $region60
          $region65: #{custom-call.10} parent=57 // loop_exit
            _
        $region58: #{custom-call.10} parent=42 // pred_fallthru
          _
        // Predicated region
        $region66: #{custom-call.10} parent=42 // pred_check
          _
        $region67: #{custom-call.10} parent=42 // pred_check_branch
          %195 = sbr.rel target = $region69
        $region68: #{custom-call.10} parent=42 // pred_region
          _
        $region69: #{custom-call.10} parent=42 // pred_fallthru
          _
      $region43: #{custom-call.10} parent=38 // pred_fallthru
        _
      // Predicated region
      $region44: #{custom-call.10} parent=38 // pred_check
        _
      $region45: #{custom-call.10} parent=38 // pred_check_branch
        %169 = sbr.rel target = $region47
      $region46: #{custom-call.10} parent=38 // pred_region
        %s171 = ssub.s32 256, 1
        loop: start=0, step=1, limit=1
        $region48: #{custom-call.10} parent=46 // loop_pre_header
          _
        $region49: #{custom-call.10} parent=46 // loop_header
          %s173 = sphi 0, %s177
          %p174 = scmp.ge.s32.totalorder %s173, 1
          %s178 = sphi [#allocation1], [#allocation1]
          %s179 = sphi %s1, %s1
        $region50: #{custom-call.10} parent=46 // loop_header_branch
          %176 = sbr.rel (%p174) target = $region54
        $region51: #{custom-call.10} parent=46 // loop_body
          %v180 = vld [vmem:[%s178] sm:%s171]
          %181 = vst [vmem:[%s179] sm:%s171] %v180
        $region52: #{custom-call.10} parent=46 // loop_footer
          %s177 = sadd.s32 1, %s173
        $region53: #{custom-call.10} parent=46 // loop_footer_branch
          %172 = sbr.rel target = $region49
        $region54: #{custom-call.10} parent=46 // loop_exit
          _
      $region47: #{custom-call.10} parent=38 // pred_fallthru
        _
    $region39: #{custom-call.10} parent=1 // pred_fallthru
      _
    %196 = vnop

// kernel: custom-call.9
$region0: #{custom-call.9}
  %s0 = inlined_call_operand.vmem [shape: f32[1,8,8], index: 0, kind: input, shape index: {}]
  %s1 = inlined_call_operand.vmem [shape: f32[1,8,8], index: 1, kind: output, shape index: {}]
  $region1: #{custom-call.9} parent=0
    #allocation0 [shape = 'u8[4096]{0}', space=vmem, size = 0x1000, scoped, tag = 'operand span for operand 0']
    #allocation1 [shape = 'u8[4096]{0}', space=vmem, size = 0x1000, scoped, tag = 'operand span for operand 1']
    #allocation2 [shape = 'f32[8,8]{1,0}', space=vmem, size = 0x1000, scoped, tag = 'rescaled input a']
    // Predicated region
    $region2: #{custom-call.9} parent=1 // pred_check
      _
    $region3: #{custom-call.9} parent=1 // pred_check_branch
      %3 = sbr.rel (0) target = $region5
    $region4: #{custom-call.9} parent=1 // pred_region
      // Predicated region
      $region6: #{custom-call.9} parent=4 // pred_check
        _
      $region7: #{custom-call.9} parent=4 // pred_check_branch
        %5 = sbr.rel (0) target = $region9
      $region8: #{custom-call.9} parent=4 // pred_region
        // Predicated region
        $region21: #{custom-call.9} parent=8 // pred_check
          _
        $region22: #{custom-call.9} parent=8 // pred_check_branch
          %21 = sbr.rel (0) target = $region24
        $region23: #{custom-call.9} parent=8 // pred_region
          loop: start=0, step=1, limit=1
          $region25: #{custom-call.9} parent=23 // loop_pre_header
            _
          $region26: #{custom-call.9} parent=23 // loop_header
            %s23 = sphi 0, %s27
            %p24 = scmp.ge.s32.totalorder %s23, 1
            %s28 = sphi %s0, %s0
            %s29 = sphi [#allocation0], [#allocation0]
          $region27: #{custom-call.9} parent=23 // loop_header_branch
            %26 = sbr.rel (%p24) target = $region31
          $region28: #{custom-call.9} parent=23 // loop_body
            %v30 = vld [vmem:[%s28] sm:$0xff]
            %31 = vst [vmem:[%s29] sm:$0xff] %v30
          $region29: #{custom-call.9} parent=23 // loop_footer
            %s27 = sadd.s32 1, %s23
          $region30: #{custom-call.9} parent=23 // loop_footer_branch
            %22 = sbr.rel target = $region26
          $region31: #{custom-call.9} parent=23 // loop_exit
            _
        $region24: #{custom-call.9} parent=8 // pred_fallthru
          _
        // Predicated region
        $region32: #{custom-call.9} parent=8 // pred_check
          _
        $region33: #{custom-call.9} parent=8 // pred_check_branch
          %33 = sbr.rel target = $region35
        $region34: #{custom-call.9} parent=8 // pred_region
          _
        $region35: #{custom-call.9} parent=8 // pred_fallthru
          _
      $region9: #{custom-call.9} parent=4 // pred_fallthru
        _
      // Predicated region
      $region10: #{custom-call.9} parent=4 // pred_check
        _
      $region11: #{custom-call.9} parent=4 // pred_check_branch
        %7 = sbr.rel target = $region13
      $region12: #{custom-call.9} parent=4 // pred_region
        %s9 = ssub.s32 256, 1
        loop: start=0, step=1, limit=1
        $region14: #{custom-call.9} parent=12 // loop_pre_header
          _
        $region15: #{custom-call.9} parent=12 // loop_header
          %s11 = sphi 0, %s15
          %p12 = scmp.ge.s32.totalorder %s11, 1
          %s16 = sphi %s0, %s0
          %s17 = sphi [#allocation0], [#allocation0]
        $region16: #{custom-call.9} parent=12 // loop_header_branch
          %14 = sbr.rel (%p12) target = $region20
        $region17: #{custom-call.9} parent=12 // loop_body
          %v18 = vld [vmem:[%s16] sm:%s9]
          %19 = vst [vmem:[%s17] sm:%s9] %v18
        $region18: #{custom-call.9} parent=12 // loop_footer
          %s15 = sadd.s32 1, %s11
        $region19: #{custom-call.9} parent=12 // loop_footer_branch
          %10 = sbr.rel target = $region15
        $region20: #{custom-call.9} parent=12 // loop_exit
          _
      $region13: #{custom-call.9} parent=4 // pred_fallthru
        _
    $region5: #{custom-call.9} parent=1 // pred_fallthru
      _
    %34 = vnop
    %v35 = vlaneseq
    %v36 = vand.u32 %v35, 127
    %vm37 = vcmp.lt.s32.totalorder %v36, 8
    %v38 = vlaneseq
    %v39 = vshrl.u32 %v38, 7
    %vm41 = vcmp.eq.s32.totalorder %v39, %v36
    %v42 = vld [vmem:[#allocation0] sm:$0xff]
    %v43 = vsel %vm41, %v42, 0.0
    %44 = vadd.xlane.f32.xlu0 %v43
    %v45 = vpop.xlane.xlu0 %44
    %vm46 = vcmp.le.s32.totalorder %v39, %v36
    %vm47 = vmand %vm46, %vm37
    %v48 = vsel %vm47, %v42, 0.0
    %v49 = vrcp.pop %v45
    %v50 = vmul.f32 %v45, %v49
    %v51 = vsub.f32 1.0, %v50
    %v52 = vmul.f32 %v49, %v51
    %v53 = vadd.f32 %v49, %v52
    %vm54 = vweird.f32 %v45
    %vm55 = vweird.f32 %v49
    %vm56 = vmor %vm54, %vm55
    %v57 = vsel %vm56, %v49, %v53
    %v58 = vand.u32 2147483647, %v45
    %vm59 = vcmp.eq.f32.partialorder %v58, 8.507059e+37
    %v60 = vand.u32 %v45, 2147483648
    %v61 = vor.u32 1.1754944e-38, %v60
    %v62 = vsel %vm59, %v61, %v57
    %v63 = vmul.f32 %v48, %v62
    %64 = vst [vmem:[#allocation2] sm:$0xff] %v63
    %v65 = vlaneseq
    %v66 = vand.u32 %v65, 127
    %v67 = vlaneseq
    %v68 = vshrl.u32 %v67, 7
    %vm70 = vcmp.eq.s32.totalorder %v66, %v68
    %v71 = vlaneseq
    %v72 = vand.u32 %v71, 127
    %vm73 = vcmp.eq.s32.totalorder %v72, 7
    %v74 = vsel %vm73, 1.0, -1.0
    %v75 = vsel %vm70, %v74, 0.0
    %s76 = scalar_lea.vmem [#allocation2], 6
    %v77 = vld [vmem:[%s76] ss:$0 sm:$0xff]
    %v78 = vxor.u32 %v77, 2147483648
    %v79 = vlaneseq
    %v80 = vand.u32 %v79, 127
    %vm81 = vcmp.eq.s32.totalorder %v80, 6
    %v82 = vmul.f32 %v78, %v75
    %83 = vadd.xlane.f32.xlu0 %v82
    %v84 = vpop.xlane.xlu0 %83
    %v85 = vsel %vm81, %v84, %v75
    %s86 = scalar_lea.vmem [#allocation2], 5
    %v87 = vld [vmem:[%s86] ss:$0 sm:$0xff]
    %v88 = vxor.u32 %v87, 2147483648
    %v89 = vlaneseq
    %v90 = vand.u32 %v89, 127
    %vm91 = vcmp.eq.s32.totalorder %v90, 5
    %v92 = vmul.f32 %v88, %v85
    %93 = vadd.xlane.f32.xlu0 %v92
    %v94 = vpop.xlane.xlu0 %93
    %v95 = vsel %vm91, %v94, %v85
    %s96 = scalar_lea.vmem [#allocation2], 4
    %v97 = vld [vmem:[%s96] ss:$0 sm:$0xff]
    %v98 = vxor.u32 %v97, 2147483648
    %v99 = vlaneseq
    %v100 = vand.u32 %v99, 127
    %vm101 = vcmp.eq.s32.totalorder %v100, 4
    %v102 = vmul.f32 %v98, %v95
    %103 = vadd.xlane.f32.xlu0 %v102
    %v104 = vpop.xlane.xlu0 %103
    %v105 = vsel %vm101, %v104, %v95
    %s106 = scalar_lea.vmem [#allocation2], 3
    %v107 = vld [vmem:[%s106] ss:$0 sm:$0xff]
    %v108 = vxor.u32 %v107, 2147483648
    %v109 = vlaneseq
    %v110 = vand.u32 %v109, 127
    %vm111 = vcmp.eq.s32.totalorder %v110, 3
    %v112 = vmul.f32 %v108, %v105
    %113 = vadd.xlane.f32.xlu0 %v112
    %v114 = vpop.xlane.xlu0 %113
    %v115 = vsel %vm111, %v114, %v105
    %s116 = scalar_lea.vmem [#allocation2], 2
    %v117 = vld [vmem:[%s116] ss:$0 sm:$0xff]
    %v118 = vxor.u32 %v117, 2147483648
    %v119 = vlaneseq
    %v120 = vand.u32 %v119, 127
    %vm121 = vcmp.eq.s32.totalorder %v120, 2
    %v122 = vmul.f32 %v118, %v115
    %123 = vadd.xlane.f32.xlu0 %v122
    %v124 = vpop.xlane.xlu0 %123
    %v125 = vsel %vm121, %v124, %v115
    %s126 = scalar_lea.vmem [#allocation2], 1
    %v127 = vld [vmem:[%s126] ss:$0 sm:$0xff]
    %v128 = vxor.u32 %v127, 2147483648
    %v129 = vlaneseq
    %v130 = vand.u32 %v129, 127
    %vm131 = vcmp.eq.s32.totalorder %v130, 1
    %v132 = vmul.f32 %v128, %v125
    %133 = vadd.xlane.f32.xlu0 %v132
    %v134 = vpop.xlane.xlu0 %133
    %v135 = vsel %vm131, %v134, %v125
    %v136 = vld [vmem:[#allocation2] ss:$0 sm:$0xff]
    %v137 = vxor.u32 %v136, 2147483648
    %v138 = vlaneseq
    %v139 = vand.u32 %v138, 127
    %vm140 = vcmp.eq.s32.totalorder %v139, 0
    %v141 = vmul.f32 %v137, %v135
    %142 = vadd.xlane.f32.xlu0 %v141
    %v143 = vpop.xlane.xlu0 %142
    %v144 = vsel %vm140, %v143, %v135
    %v145 = vrcp.pop %v45
    %v146 = vmul.f32 %v45, %v145
    %v147 = vsub.f32 1.0, %v146
    %v148 = vmul.f32 %v145, %v147
    %v149 = vadd.f32 %v145, %v148
    %vm150 = vweird.f32 %v45
    %vm151 = vweird.f32 %v145
    %vm152 = vmor %vm150, %vm151
    %v153 = vsel %vm152, %v145, %v149
    %v154 = vand.u32 2147483647, %v45
    %vm155 = vcmp.eq.f32.partialorder %v154, 8.507059e+37
    %v156 = vand.u32 %v45, 2147483648
    %v157 = vor.u32 1.1754944e-38, %v156
    %v158 = vsel %vm155, %v157, %v153
    %v159 = vmul.f32 %v144, %v158
    %vm160 = vweird.f32 %v45
    %v161 = vsel %vm160, %v144, %v159
    %162 = vst [vmem:[#allocation1] sm:$0xff] %v161
    // Predicated region
    $region36: #{custom-call.9} parent=1 // pred_check
      _
    $region37: #{custom-call.9} parent=1 // pred_check_branch
      %164 = sbr.rel (0) target = $region39
    $region38: #{custom-call.9} parent=1 // pred_region
      // Predicated region
      $region40: #{custom-call.9} parent=38 // pred_check
        _
      $region41: #{custom-call.9} parent=38 // pred_check_branch
        %166 = sbr.rel (0) target = $region43
      $region42: #{custom-call.9} parent=38 // pred_region
        // Predicated region
        $region55: #{custom-call.9} parent=42 // pred_check
          _
        $region56: #{custom-call.9} parent=42 // pred_check_branch
          %182 = sbr.rel (0) target = $region58
        $region57: #{custom-call.9} parent=42 // pred_region
          loop: start=0, step=1, limit=1
          $region59: #{custom-call.9} parent=57 // loop_pre_header
            _
          $region60: #{custom-call.9} parent=57 // loop_header
            %s184 = sphi 0, %s188
            %p185 = scmp.ge.s32.totalorder %s184, 1
            %s189 = sphi [#allocation1], [#allocation1]
            %s190 = sphi %s1, %s1
          $region61: #{custom-call.9} parent=57 // loop_header_branch
            %187 = sbr.rel (%p185) target = $region65
          $region62: #{custom-call.9} parent=57 // loop_body
            %v191 = vld [vmem:[%s189] sm:$0xff]
            %192 = vst [vmem:[%s190] sm:$0xff] %v191
          $region63: #{custom-call.9} parent=57 // loop_footer
            %s188 = sadd.s32 1, %s184
          $region64: #{custom-call.9} parent=57 // loop_footer_branch
            %183 = sbr.rel target = $region60
          $region65: #{custom-call.9} parent=57 // loop_exit
            _
        $region58: #{custom-call.9} parent=42 // pred_fallthru
          _
        // Predicated region
        $region66: #{custom-call.9} parent=42 // pred_check
          _
        $region67: #{custom-call.9} parent=42 // pred_check_branch
          %194 = sbr.rel target = $region69
        $region68: #{custom-call.9} parent=42 // pred_region
          _
        $region69: #{custom-call.9} parent=42 // pred_fallthru
          _
      $region43: #{custom-call.9} parent=38 // pred_fallthru
        _
      // Predicated region
      $region44: #{custom-call.9} parent=38 // pred_check
        _
      $region45: #{custom-call.9} parent=38 // pred_check_branch
        %168 = sbr.rel target = $region47
      $region46: #{custom-call.9} parent=38 // pred_region
        %s170 = ssub.s32 256, 1
        loop: start=0, step=1, limit=1
        $region48: #{custom-call.9} parent=46 // loop_pre_header
          _
        $region49: #{custom-call.9} parent=46 // loop_header
          %s172 = sphi 0, %s176
          %p173 = scmp.ge.s32.totalorder %s172, 1
          %s177 = sphi [#allocation1], [#allocation1]
          %s178 = sphi %s1, %s1
        $region50: #{custom-call.9} parent=46 // loop_header_branch
          %175 = sbr.rel (%p173) target = $region54
        $region51: #{custom-call.9} parent=46 // loop_body
          %v179 = vld [vmem:[%s177] sm:%s170]
          %180 = vst [vmem:[%s178] sm:%s170] %v179
        $region52: #{custom-call.9} parent=46 // loop_footer
          %s176 = sadd.s32 1, %s172
        $region53: #{custom-call.9} parent=46 // loop_footer_branch
          %171 = sbr.rel target = $region49
        $region54: #{custom-call.9} parent=46 // loop_exit
          _
      $region47: #{custom-call.9} parent=38 // pred_fallthru
        _
    $region39: #{custom-call.9} parent=1 // pred_fallthru
      _
    %195 = vnop

// kernel: least_squares_fit.1
$region0: #{least_squares_fit.1}
  #allocation0 [shape = 'u32[]', space=smem, size = 0x4, offset = 0x4, fixed_abs, tag = 'smem constant byte address 0x4 - core index']
  #allocation1 [shape = 'u32[72,128]{1,0:T(1,128)}', space=vmem, size = 0x9000, scoped, tag = 'internal scratch']
  %s0 = inlined_call_operand.vmem [shape: f32[9,2048], index: 0, kind: input, shape index: {}]
  %s1 = inlined_call_operand.vmem [shape: f32[1,9,9], index: 1, kind: output, shape index: {}]
  %s2 = sld [smem:[#allocation0]]
  $region64: #{least_squares_fit.1} parent=0
    _
  %s4 = ssub.s32 1, %s2
  %s5 = scalar_select 0, %s4, %s2
  $region1: #{least_squares_fit.1} parent=0
    #allocation2 [shape = 'u8[65536]{0}', space=vmem, size = 0x10000, scoped, tag = 'input window, operand 0']
    loop: start=0, step=1, limit=6
    $region2: #{least_squares_fit.1} parent=1 // loop_pre_header
      _
    $region3: #{least_squares_fit.1} parent=1 // loop_header
      %s7 = sphi 0, %s11
      %p8 = scmp.ge.s32.totalorder %s7, 6
      %s14 = sphi 0, %s26
      %s15 = sphi 0, %s22
      %s16 = sphi 0, %s14
      %s17 = sphi 0, %s15
      %s18 = sphi 0, %s16
      %s19 = sphi 0, %s17
      %s33 = sphi 0, %s35
      %s36 = sphi 0, %s33
      %s37 = sphi 0, %s36
      %s53 = sphi 0, %s37
      %s59 = sphi 0, %s61
      %s62 = sphi 0, %s59
      %s63 = sphi 0, %s62
      %s79 = sphi 0, %s63
    $region4: #{least_squares_fit.1} parent=1 // loop_header_branch
      %10 = sbr.rel (%p8) target = $region8
    $region5: #{least_squares_fit.1} parent=1 // loop_body
      %s12 = ssub.s32 %s7, 1
      %s13 = ssub.s32 %s7, 2
      %s20 = sadd.s32 1, %s15
      %p21 = scmp.ge.s32.totalorder %s20, 4
      %s22 = scalar_select %p21, 0, %s20
      %s23 = sadd.s32 1, %s14
      %s24 = scalar_select %p21, %s23, %s14
      %p25 = scmp.ge.s32.totalorder %s24, 1
      %s26 = scalar_select %p25, 0, %s24
      %s27 = smul.u32 %s14, 4
      %s28 = sadd.s32 %s27, %s15
      %s29 = smul.u32 %s26, 4
      %s30 = sadd.s32 %s29, %s22
      %s31 = ssub.s32 %s28, %s30
      %p32 = scmp.eq.s32.totalorder %s31, 0
      %s34 = sadd.s32 %s33, 1
      %s35 = scalar_select %p32, %s33, %s34
      %p38 = pneg %p32
      %p39 = scmp.eq.s32.totalorder %s7, 3
      %p40 = por %p38, %p39
      %p41 = scmp.ne.s32.totalorder %s33, %s36
      %p42 = scmp.eq.s32.totalorder %s7, 0
      %p43 = por %p41, %p42
      %p44 = scmp.ne.s32.totalorder %s33, %s36
      %p45 = scmp.eq.s32.totalorder %s12, 3
      %p46 = por %p44, %p45
      %p47 = scmp.ne.s32.totalorder %s36, %s37
      %p48 = scmp.eq.s32.totalorder %s12, 0
      %p49 = por %p47, %p48
      %p50 = scmp.ne.s32.totalorder %s36, %s37
      %p51 = scmp.eq.s32.totalorder %s13, 3
      %p52 = por %p50, %p51
      %p54 = scmp.ne.s32.totalorder %s37, %s53
      %p55 = scmp.eq.s32.totalorder %s13, 0
      %p56 = por %p54, %p55
      %s57 = ssub.s32 %s14, %s26
      %p58 = scmp.eq.s32.totalorder %s57, 0
      %s60 = sadd.s32 %s59, 1
      %s61 = scalar_select %p58, %s59, %s60
      %p64 = pneg %p58
      %p65 = scmp.eq.s32.totalorder %s7, 3
      %p66 = por %p64, %p65
      %p67 = scmp.ne.s32.totalorder %s59, %s62
      %p68 = scmp.eq.s32.totalorder %s7, 0
      %p69 = por %p67, %p68
      %p70 = scmp.ne.s32.totalorder %s59, %s62
      %p71 = scmp.eq.s32.totalorder %s12, 3
      %p72 = por %p70, %p71
      %p73 = scmp.ne.s32.totalorder %s62, %s63
      %p74 = scmp.eq.s32.totalorder %s12, 0
      %p75 = por %p73, %p74
      %p76 = scmp.ne.s32.totalorder %s62, %s63
      %p77 = scmp.eq.s32.totalorder %s13, 3
      %p78 = por %p76, %p77
      %p80 = scmp.ne.s32.totalorder %s63, %s79
      %p81 = scmp.eq.s32.totalorder %s13, 0
      %p82 = por %p80, %p81
      %p83 = scmp.le.s32.totalorder 1, %s7
      %p84 = scmp.lt.s32.totalorder %s7, 5
      %p85 = pnand %p83, %p84
      %p86 = pneg %p85
      // Predicated region
      $region9: #{least_squares_fit.1} parent=5 // pred_check
        _
      $region10: #{least_squares_fit.1} parent=5 // pred_check_branch
        %88 = sbr.rel (%p85) target = $region12
      $region11: #{least_squares_fit.1} parent=5 // pred_region
        %s89 = ssub.s32 %s7, 1
      $region12: #{least_squares_fit.1} parent=5 // pred_fallthru
        _
      %p90 = scmp.lt.s32.totalorder %s7, 4
      // Predicated region
      $region13: #{least_squares_fit.1} parent=5 // pred_check
        %p91 = pneg %p90
      $region14: #{least_squares_fit.1} parent=5 // pred_check_branch
        %93 = sbr.rel (%p91) target = $region16
      $region15: #{least_squares_fit.1} parent=5 // pred_region
        // Predicated region
        $region17: #{least_squares_fit.1} parent=15 // pred_check
          %p94 = pneg %p43
        $region18: #{least_squares_fit.1} parent=15 // pred_check_branch
          %96 = sbr.rel (%p94) target = $region20
        $region19: #{least_squares_fit.1} parent=15 // pred_region
          %s97 = sand.u32 %s33, 1
          %s98 = sand.u32 %s33, 1
          %s99 = smul.addr %s98, 64
          %s100 = scalar_lea.vmem [#allocation2], %s99
          %s101 = smul.u32 %s14, 4
          %s102 = sadd.s32 %s101, %s15
          %s103 = smul.u32 4, %s102
          %s104 = smul.addr %s103, 8
          %s105 = scalar_lea.vmem %s0, %s104
          // Predicated region
          $region21: #{least_squares_fit.1} parent=19 // pred_check
            _
          $region22: #{least_squares_fit.1} parent=19 // pred_check_branch
            %107 = sbr.rel (0) target = $region24
          $region23: #{least_squares_fit.1} parent=19 // pred_region
            // Predicated region
            $region25: #{least_squares_fit.1} parent=23 // pred_check
              _
            $region26: #{least_squares_fit.1} parent=23 // pred_check_branch
              %109 = sbr.rel (0) target = $region28
            $region27: #{least_squares_fit.1} parent=23 // pred_region
              loop: start=0, step=1, limit=1
              $region29: #{least_squares_fit.1} parent=27 // loop_pre_header
                _
              $region30: #{least_squares_fit.1} parent=27 // loop_header
                %s111 = sphi 0, %s115
                %p112 = scmp.ge.s32.totalorder %s111, 1
                %s116 = sphi %s105, %s105
                %s117 = sphi %s100, %s100
              $region31: #{least_squares_fit.1} parent=27 // loop_header_branch
                %114 = sbr.rel (%p112) target = $region35
              $region32: #{least_squares_fit.1} parent=27 // loop_body
                %v118 = vld [vmem:[%s116] sm:$0xff]
                %119 = vst [vmem:[%s117] sm:$0xff] %v118
                %v120 = vld [vmem:[%s116 + $0x8] sm:$0xff]
                %121 = vst [vmem:[%s117 + $0x8] sm:$0xff] %v120
                %v122 = vld [vmem:[%s116 + $0x10] sm:$0xff]
                %123 = vst [vmem:[%s117 + $0x10] sm:$0xff] %v122
                %v124 = vld [vmem:[%s116 + $0x18] sm:$0xff]
                %125 = vst [vmem:[%s117 + $0x18] sm:$0xff] %v124
                %v126 = vld [vmem:[%s116 + $0x80] sm:$0xff]
                %127 = vst [vmem:[%s117 + $0x20] sm:$0xff] %v126
                %v128 = vld [vmem:[%s116 + $0x88] sm:$0xff]
                %129 = vst [vmem:[%s117 + $0x28] sm:$0xff] %v128
                %v130 = vld [vmem:[%s116 + $0x90] sm:$0xff]
                %131 = vst [vmem:[%s117 + $0x30] sm:$0xff] %v130
                %v132 = vld [vmem:[%s116 + $0x98] sm:$0xff]
                %133 = vst [vmem:[%s117 + $0x38] sm:$0xff] %v132
              $region33: #{least_squares_fit.1} parent=27 // loop_footer
                %s115 = sadd.s32 1, %s111
              $region34: #{least_squares_fit.1} parent=27 // loop_footer_branch
                %110 = sbr.rel target = $region30
              $region35: #{least_squares_fit.1} parent=27 // loop_exit
                _
            $region28: #{least_squares_fit.1} parent=23 // pred_fallthru
              _
            // Predicated region
            $region36: #{least_squares_fit.1} parent=23 // pred_check
              _
            $region37: #{least_squares_fit.1} parent=23 // pred_check_branch
              %135 = sbr.rel target = $region39
            $region38: #{least_squares_fit.1} parent=23 // pred_region
              _
            $region39: #{least_squares_fit.1} parent=23 // pred_fallthru
              _
          $region24: #{least_squares_fit.1} parent=19 // pred_fallthru
            _
          %136 = vnop
        $region20: #{least_squares_fit.1} parent=15 // pred_fallthru
          _
      $region16: #{least_squares_fit.1} parent=5 // pred_fallthru
        _
      %p137 = scmp.le.s32.totalorder 1, %s7
      %p138 = scmp.lt.s32.totalorder %s7, 5
      %p139 = pnand %p137, %p138
      %p140 = pneg %p139
      // Predicated region
      $region40: #{least_squares_fit.1} parent=5 // pred_check
        _
      $region41: #{least_squares_fit.1} parent=5 // pred_check_branch
        %142 = sbr.rel (%p139) target = $region43
      $region42: #{least_squares_fit.1} parent=5 // pred_region
        %s143 = ssub.s32 %s7, 1
        %s144 = sand.u32 %s36, 1
        %s145 = sand.u32 %s36, 1
        %s146 = smul.addr %s145, 64
        %s147 = scalar_lea.vmem [#allocation2], %s146
        // Predicated region
        $region44: #{least_squares_fit.1} parent=42 // pred_check
          %p148 = pneg %p49
        $region45: #{least_squares_fit.1} parent=42 // pred_check_branch
          %150 = sbr.rel (%p148) target = $region47
        $region46: #{least_squares_fit.1} parent=42 // pred_region
          _
        $region47: #{least_squares_fit.1} parent=42 // pred_fallthru
          _
        %s151 = sand.u32 %s36, 1
        %s152 = sand.u32 %s36, 1
        %s153 = smul.addr %s152, 64
        %s154 = scalar_lea.vmem [#allocation2], %s153
        %p155 = pneg %p49
        %p156 = pneg %p46
        %p157 = pneg %p75
        %p158 = pneg %p72
        %p159 = scmp.lt.s32.totalorder %s16, 0
        %s160 = scalar_select %p159, %s16, 0
        %s161 = smul.addr %s160, 2
        %s162 = smul.addr %s161, 8
        %s163 = scalar_lea.vmem %s1, %s162
        %s164 = smul.u32 %s16, 4
        %s165 = sadd.s32 %s164, %s17
        %s166 = smul.u32 4, %s165
        %p167 = scmp.lt.s32.totalorder %s16, 0
        %s168 = scalar_select %p167, %s16, 0
        %s169 = smul.addr %s168, 2
        %s170 = smul.addr %s169, 8
        %s171 = scalar_lea.vmem %s1, %s170
        %p172 = scmp.eq.s32.totalorder %s17, 0
        // Predicated region
        $region48: #{least_squares_fit.1} parent=42 // pred_check
          %p173 = pneg %p172
        $region49: #{least_squares_fit.1} parent=42 // pred_check_branch
          %175 = sbr.rel (%p173) target = $region51
        $region50: #{least_squares_fit.1} parent=42 // pred_region
          %vm176 = vcmask 72704
          %177 = vst.msk [vmem:[%s171] sm:$0xff] %vm176, 0.0
          %vm178 = vcmask 65536
          %179 = vst.msk [vmem:[%s171 + $0x8] sm:$0x1] %vm178, 0.0
        $region51: #{least_squares_fit.1} parent=42 // pred_fallthru
          _
        %v180 = vld [vmem:[%s147] sm:$0xff]
        %v181 = vld [vmem:[%s147 + $0x8] sm:$0xff]
        %v182 = vld [vmem:[%s147 + $0x10] sm:$0xff]
        %v183 = vld [vmem:[%s147 + $0x18] sm:$0xff]
        %v184 = vld [vmem:[%s147 + $0x20] sm:$0x1]
        %v185 = vld [vmem:[%s147 + $0x28] sm:$0x1]
        %v186 = vld [vmem:[%s147 + $0x30] sm:$0x1]
        %v187 = vld [vmem:[%s147 + $0x38] sm:$0x1]
        %v188 = vld [vmem:[%s171] sm:$0xff]
        %v189 = vld [vmem:[%s171 + $0x8] sm:$0x1]
        %190 = vmatpush.xpose.msra.mxu0 0.0
        %191 = vmatpush.xpose.msra.mxu0 0.0
        %192 = vmatpush.xpose.msra.mxu0 0.0
        %193 = vmatpush.xpose.msra.mxu0 0.0
        %194 = vmatpush.xpose.msra.mxu0 0.0
        %195 = vmatpush.xpose.msra.mxu0 0.0
        %196 = vmatpush.xpose.msra.mxu0 0.0
        %197 = vmatpush.xpose.msra.mxu0 0.0
        %198 = vmatpush.xpose.msra.mxu0 0.0
        %199 = vmatpush.xpose.msra.mxu0 0.0
        %200 = vmatpush.xpose.msra.mxu0 0.0
        %201 = vmatpush.xpose.msra.mxu0 0.0
        %202 = vmatpush.xpose.msra.mxu0 0.0
        %203 = vmatpush.xpose.msra.mxu0 0.0
        %204 = vmatpush.xpose.msra.mxu0 %v184
        %205 = vmatpush.xpose.msra.mxu0 %v180
        %206 = vmatmul.f32.gmra.mxu0 %v180
        %v207 = vpop.f32.mrf.mxu0
        %v208 = vadd.f32 0.0, %v207
        %209 = vmatmul.f32.gmra.mxu0 %v184
        %v210 = vpop.f32.mrf.mxu0
        %v211 = vadd.f32 0.0, %v210
        %212 = vdwg.mxu0
        %213 = vmatpush.xpose.msra.mxu0 0.0
        %214 = vmatpush.xpose.msra.mxu0 0.0
        %215 = vmatpush.xpose.msra.mxu0 0.0
        %216 = vmatpush.xpose.msra.mxu0 0.0
        %217 = vmatpush.xpose.msra.mxu0 0.0
        %218 = vmatpush.xpose.msra.mxu0 0.0
        %219 = vmatpush.xpose.msra.mxu0 0.0
        %220 = vmatpush.xpose.msra.mxu0 0.0
        %221 = vmatpush.xpose.msra.mxu0 0.0
        %222 = vmatpush.xpose.msra.mxu0 0.0
        %223 = vmatpush.xpose.msra.mxu0 0.0
        %224 = vmatpush.xpose.msra.mxu0 0.0
        %225 = vmatpush.xpose.msra.mxu0 0.0
        %226 = vmatpush.xpose.msra.mxu0 0.0
        %227 = vmatpush.xpose.msra.mxu0 %v185
        %228 = vmatpush.xpose.msra.mxu0 %v181
        %229 = vmatmul.f32.gmra.mxu0 %v181
        %v230 = vpop.f32.mrf.mxu0
        %v231 = vadd.f32 %v208, %v230
        %232 = vmatmul.f32.gmra.mxu0 %v185
        %v233 = vpop.f32.mrf.mxu0
        %v234 = vadd.f32 %v211, %v233
        %235 = vdwg.mxu0
        %236 = vmatpush.xpose.msra.mxu0 0.0
        %237 = vmatpush.xpose.msra.mxu0 0.0
        %238 = vmatpush.xpose.msra.mxu0 0.0
        %239 = vmatpush.xpose.msra.mxu0 0.0
        %240 = vmatpush.xpose.msra.mxu0 0.0
        %241 = vmatpush.xpose.msra.mxu0 0.0
        %242 = vmatpush.xpose.msra.mxu0 0.0
        %243 = vmatpush.xpose.msra.mxu0 0.0
        %244 = vmatpush.xpose.msra.mxu0 0.0
        %245 = vmatpush.xpose.msra.mxu0 0.0
        %246 = vmatpush.xpose.msra.mxu0 0.0
        %247 = vmatpush.xpose.msra.mxu0 0.0
        %248 = vmatpush.xpose.msra.mxu0 0.0
        %249 = vmatpush.xpose.msra.mxu0 0.0
        %250 = vmatpush.xpose.msra.mxu0 %v186
        %251 = vmatpush.xpose.msra.mxu0 %v182
        %252 = vmatmul.f32.gmra.mxu0 %v182
        %v253 = vpop.f32.mrf.mxu0
        %v254 = vadd.f32 %v231, %v253
        %255 = vmatmul.f32.gmra.mxu0 %v186
        %v256 = vpop.f32.mrf.mxu0
        %v257 = vadd.f32 %v234, %v256
        %258 = vdwg.mxu0
        %259 = vmatpush.xpose.msra.mxu0 0.0
        %260 = vmatpush.xpose.msra.mxu0 0.0
        %261 = vmatpush.xpose.msra.mxu0 0.0
        %262 = vmatpush.xpose.msra.mxu0 0.0
        %263 = vmatpush.xpose.msra.mxu0 0.0
        %264 = vmatpush.xpose.msra.mxu0 0.0
        %265 = vmatpush.xpose.msra.mxu0 0.0
        %266 = vmatpush.xpose.msra.mxu0 0.0
        %267 = vmatpush.xpose.msra.mxu0 0.0
        %268 = vmatpush.xpose.msra.mxu0 0.0
        %269 = vmatpush.xpose.msra.mxu0 0.0
        %270 = vmatpush.xpose.msra.mxu0 0.0
        %271 = vmatpush.xpose.msra.mxu0 0.0
        %272 = vmatpush.xpose.msra.mxu0 0.0
        %273 = vmatpush.xpose.msra.mxu0 %v187
        %274 = vmatpush.xpose.msra.mxu0 %v183
        %275 = vmatmul.f32.gmra.mxu0 %v183
        %v276 = vpop.f32.mrf.mxu0
        %v277 = vadd.f32 %v254, %v276
        %278 = vmatmul.f32.gmra.mxu0 %v187
        %v279 = vpop.f32.mrf.mxu0
        %v280 = vadd.f32 %v257, %v279
        %281 = vdwg.mxu0
        %v282 = vadd.f32 %v188, %v277
        %v283 = vadd.f32 %v189, %v280
        %vm284 = vcmask 72704
        %285 = vst.msk [vmem:[%s171] sm:$0xff] %vm284, %v282
        %vm286 = vcmask 65536
        %287 = vst.msk [vmem:[%s171 + $0x8] sm:$0x1] %vm286, %v283
        %p288 = scmp.lt.s32.totalorder %s16, 0
        %s289 = scalar_select %p288, %s16, 0
        %s290 = smul.addr %s289, 2
        %s291 = smul.addr %s290, 8
        %s292 = scalar_lea.vmem %s1, %s291
        // Predicated region
        $region52: #{least_squares_fit.1} parent=42 // pred_check
          %p293 = pneg %p72
        $region53: #{least_squares_fit.1} parent=42 // pred_check_branch
          %295 = sbr.rel (%p293) target = $region55
        $region54: #{least_squares_fit.1} parent=42 // pred_region
          _
        $region55: #{least_squares_fit.1} parent=42 // pred_fallthru
          _
        // Predicated region
        $region56: #{least_squares_fit.1} parent=42 // pred_check
          %p296 = pneg %p72
        $region57: #{least_squares_fit.1} parent=42 // pred_check_branch
          %298 = sbr.rel (%p296) target = $region59
        $region58: #{least_squares_fit.1} parent=42 // pred_region
          %p299 = scmp.lt.s32.totalorder %s16, 0
          %s300 = scalar_select %p299, %s16, 0
          %s301 = smul.addr %s300, 2
          %s302 = smul.addr %s301, 8
          %s303 = scalar_lea.vmem %s1, %s302
        $region59: #{least_squares_fit.1} parent=42 // pred_fallthru
          _
      $region43: #{least_squares_fit.1} parent=5 // pred_fallthru
        _
      %p304 = scmp.le.s32.totalorder 2, %s7
      // Predicated region
      $region60: #{least_squares_fit.1} parent=5 // pred_check
        %p305 = pneg %p304
      $region61: #{least_squares_fit.1} parent=5 // pred_check_branch
        %307 = sbr.rel (%p305) target = $region63
      $region62: #{least_squares_fit.1} parent=5 // pred_region
        %s308 = ssub.s32 %s7, 2
      $region63: #{least_squares_fit.1} parent=5 // pred_fallthru
        _
    $region6: #{least_squares_fit.1} parent=1 // loop_footer
      %s11 = sadd.s32 1, %s7
    $region7: #{least_squares_fit.1} parent=1 // loop_footer_branch
      %6 = sbr.rel target = $region3
    $region8: #{least_squares_fit.1} parent=1 // loop_exit
      _

</llo_original>
